<compile_context>
chip_gen: v7x
topology: tpu7x:2x2x1
jax: 0.10.0
libtpu: 0.0.40
codegen_flags: <defaults>
</compile_context>

<pallas_src>
import functools

import jax
import jax.numpy as jnp
from jax.experimental import pallas as pl
from jax.experimental.pallas import tpu as pltpu


def _round_up(x: int, m: int) -> int:
    return ((x + m - 1) // m) * m


def _ppo_fused_kernel(x_ref, w1_ref, b1_ref, w2_ref, b2_ref, w3_ref, b3_ref,
                      out_ref):
    x = x_ref[...]
    # Hoist bias loads/broadcasts once per invocation.
    b1 = b1_ref[...]
    b2 = b2_ref[...]
    b3 = b3_ref[...]

    h = jnp.dot(x, w1_ref[...], preferred_element_type=jnp.float32) + b1
    h = jnp.maximum(h, 0.0)
    h = jnp.dot(h, w2_ref[...], preferred_element_type=jnp.float32) + b2
    h = jnp.maximum(h, 0.0)
    out = jnp.dot(h, w3_ref[...], preferred_element_type=jnp.float32) + b3
    out_ref[...] = out.astype(out_ref.dtype)


def _pack_params(critic_params, actor_params):
    """Pack actor+critic into fused wide / block-diagonal weights."""
    cw1, cb1, cw2, cb2, cw3, cb3 = critic_params
    aw1, ab1, aw2, ab2, aw3, ab3 = actor_params
    H = cw1.shape[1]                      # hidden = 32
    A = aw3.shape[1]

    w1 = jnp.concatenate([cw1, aw1], axis=1)                      # (F, 2H)
    b1 = jnp.concatenate([cb1, ab1], axis=1)                      # (1, 2H)

    zHH = jnp.zeros((H, H), jnp.float32)
    w2 = jnp.concatenate(
        [jnp.concatenate([cw2, zHH], axis=1),
         jnp.concatenate([zHH, aw2], axis=1)], axis=0)            # (2H, 2H)
    b2 = jnp.concatenate([cb2, ab2], axis=1)                      # (1, 2H)

    w3 = jnp.concatenate(
        [jnp.concatenate([cw3, jnp.zeros((H, A), jnp.float32)], axis=1),
         jnp.concatenate([jnp.zeros((H, 1), jnp.float32), aw3], axis=1)],
        axis=0)                                                   # (2H, 1+A)
    b3 = jnp.concatenate([cb3, ab3], axis=1)                      # (1, 1+A)
    return w1, b1, w2, b2, w3, b3, A


@functools.partial(jax.jit, static_argnames=("tb",))
def _ppo_forward_packed(x, w1, b1, w2, b2, w3, b3, *, tb):
    B, F = x.shape
    OUT = w3.shape[1]                     # 1 + A

    # Pad batch so the grid evenly covers it and TB is a multiple of 8.
    b_pad = _round_up(max(B, 1), tb)
    if b_pad != B:
        x = jnp.pad(x, ((0, b_pad - B), (0, 0)))
    grid = (b_pad // tb,)

    def _resident(shape):
        # Full-array block; same block index every grid step -> stays in VMEM.
        return pl.BlockSpec(shape, lambda i: tuple(0 for _ in shape))

    flops = 2 * b_pad * (F * w1.shape[1] + w2.shape[0] * w2.shape[1]
                         + w3.shape[0] * OUT)
    bytes_accessed = 4 * (b_pad * F + b_pad * OUT
                          + w1.size + b1.size + w2.size + b2.size
                          + w3.size + b3.size)

    out = pl.pallas_call(
        _ppo_fused_kernel,
        out_shape=jax.ShapeDtypeStruct((b_pad, OUT), jnp.float32),
        grid_spec=pltpu.PrefetchScalarGridSpec(
            num_scalar_prefetch=0,
            grid=grid,
            in_specs=[
                pl.BlockSpec((tb, F), lambda i: (i, 0)),   # x: batch-tiled
                _resident(w1.shape), _resident(b1.shape),
                _resident(w2.shape), _resident(b2.shape),
                _resident(w3.shape), _resident(b3.shape),
            ],
            out_specs=pl.BlockSpec((tb, OUT), lambda i: (i, 0)),
        ),
        compiler_params=pltpu.CompilerParams(
            dimension_semantics=("parallel",),   # shard batch across v7x TCs
            vmem_limit_bytes=64 << 20,
        ),
        cost_estimate=pl.CostEstimate(
            flops=flops, transcendentals=0, bytes_accessed=bytes_accessed),
    )(x, w1, b1, w2, b2, w3, b3)

    return out[:B]


def ppo_forward(x, critic_params, actor_params, *, tb=None):
    """x: (B, F) float32.  Returns (state_values (B,1), action_logits (B,A))."""
    B = x.shape[0]
    w1, b1, w2, b2, w3, b3, A = _pack_params(critic_params, actor_params)
    if tb is None:
        # One tile for small batches; 512-row tiles (multiple of 8, well within
        # v7x's 64 MiB VMEM budget even with double-buffering) for large ones.
        tb = _round_up(B, 8) if B <= 512 else 512
    out = _ppo_forward_packed(x, w1, b1, w2, b2, w3, b3, tb=tb)
    values = out[:, :1]
    logits = out[:, 1:1 + A]
    return values, logits


def init_linear(key, fan_in, fan_out):
    """Deterministic init mimicking torch.nn.Linear (uniform(-1/sqrt(in), 1/sqrt(in)))."""
    kw, kb = jax.random.split(key)
    bound = 1.0 / jnp.sqrt(jnp.float32(fan_in))
    # stored (in, out) so kernel uses x @ W  (== PyTorch x @ W_torch.T)
    w = jax.random.uniform(kw, (fan_in, fan_out), jnp.float32, -bound, bound)
    b = jax.random.uniform(kb, (1, fan_out), jnp.float32, -bound, bound)
    return w, b


def ppo_forward_ref(x, critic_params, actor_params):
    """Pure-JAX reference for correctness checking."""
    cw1, cb1, cw2, cb2, cw3, cb3 = critic_params
    aw1, ab1, aw2, ab2, aw3, ab3 = actor_params
    h = jnp.maximum(x @ cw1 + cb1, 0.0)
    h = jnp.maximum(h @ cw2 + cb2, 0.0)
    v = h @ cw3 + cb3
    g = jnp.maximum(x @ aw1 + ab1, 0.0)
    g = jnp.maximum(g @ aw2 + ab2, 0.0)
    logits = g @ aw3 + ab3
    return v, logits


if __name__ == "__main__":
    n_features = 8
    n_actions = 4
    batch = 8          # n_envs
    hidden = 32

    key = jax.random.PRNGKey(0)
    keys = jax.random.split(key, 8)

    # critic: F->32->32->1 ; actor: F->32->32->A
    critic_params = (
        *init_linear(keys[0], n_features, hidden),
        *init_linear(keys[1], hidden, hidden),
        *init_linear(keys[2], hidden, 1),
    )
    actor_params = (
        *init_linear(keys[3], n_features, hidden),
        *init_linear(keys[4], hidden, hidden),
        *init_linear(keys[5], hidden, n_actions),
    )

    # --- main test: B = n_envs = 8, single grid step ---
    x = jax.random.normal(keys[6], (batch, n_features), jnp.float32)
    values, logits = ppo_forward(x, critic_params, actor_params)
    values = jax.block_until_ready(values)
    logits = jax.block_until_ready(logits)

    v_ref, l_ref = ppo_forward_ref(x, critic_params, actor_params)
    assert values.shape == (batch, n_actions * 0 + 1)
    assert logits.shape == (batch, n_actions)
    assert jnp.allclose(values, v_ref, atol=1e-5, rtol=1e-5)
    assert jnp.allclose(logits, l_ref, atol=1e-5, rtol=1e-5)

    # --- second test: ragged batch with multi-step grid (exercises padding,
    #     batch tiling, and VMEM-resident weights across grid iterations) ---
    x2 = jax.random.normal(keys[7], (20, n_features), jnp.float32)
    v2, l2 = ppo_forward(x2, critic_params, actor_params, tb=8)
    v2 = jax.block_until_ready(v2)
    l2 = jax.block_until_ready(l2)
    v2_ref, l2_ref = ppo_forward_ref(x2, critic_params, actor_params)
    assert v2.shape == (20, 1) and l2.shape == (20, n_actions)
    assert jnp.allclose(v2, v2_ref, atol=1e-5, rtol=1e-5)
    assert jnp.allclose(l2, l2_ref, atol=1e-5, rtol=1e-5)

    print("KERNEL_OK")
</pallas_src>

<mosaic_0001>
module attributes {stable_mosaic.version = 11 : i64} {
  func.func @_ppo_fused_kernel(%arg0: i32, %arg1: memref<8x8xf32, #tpu.memory_space<vmem>>, %arg2: memref<8x64xf32, #tpu.memory_space<vmem>>, %arg3: memref<1x64xf32, #tpu.memory_space<vmem>>, %arg4: memref<64x64xf32, #tpu.memory_space<vmem>>, %arg5: memref<1x64xf32, #tpu.memory_space<vmem>>, %arg6: memref<64x5xf32, #tpu.memory_space<vmem>>, %arg7: memref<1x5xf32, #tpu.memory_space<vmem>>, %arg8: memref<8x5xf32, #tpu.memory_space<vmem>>) attributes {dimension_semantics = [#tpu.dimension_semantics<parallel>], iteration_bounds = array<i64: 1>, scalar_prefetch = 0 : i64, scratch_operands = 0 : i64, tpu.core_type = #tpu.core_type<tc>, window_params = [{transform_indices = @transform_0, window_bounds = array<i64: 8, 8>}, {pipeline_mode = #tpu.pipeline_mode<synchronous>, transform_indices = @transform_1, window_bounds = array<i64: 8, 64>}, {pipeline_mode = #tpu.pipeline_mode<synchronous>, transform_indices = @transform_2, window_bounds = array<i64: 1, 64>}, {pipeline_mode = #tpu.pipeline_mode<synchronous>, transform_indices = @transform_3, window_bounds = array<i64: 64, 64>}, {pipeline_mode = #tpu.pipeline_mode<synchronous>, transform_indices = @transform_4, window_bounds = array<i64: 1, 64>}, {pipeline_mode = #tpu.pipeline_mode<synchronous>, transform_indices = @transform_5, window_bounds = array<i64: 64, 5>}, {pipeline_mode = #tpu.pipeline_mode<synchronous>, transform_indices = @transform_6, window_bounds = array<i64: 1, 5>}, {transform_indices = @transform_7, window_bounds = array<i64: 8, 5>}]} {
    %c0 = arith.constant 0 : index
    %c0_0 = arith.constant 0 : index
    %0 = vector.load %arg1[%c0, %c0_0] : memref<8x8xf32, #tpu.memory_space<vmem>>, vector<8x8xf32>
    %c0_1 = arith.constant 0 : index
    %c0_2 = arith.constant 0 : index
    %1 = vector.load %arg3[%c0_1, %c0_2] : memref<1x64xf32, #tpu.memory_space<vmem>>, vector<1x64xf32>
    %c0_3 = arith.constant 0 : index
    %c0_4 = arith.constant 0 : index
    %2 = vector.load %arg5[%c0_3, %c0_4] : memref<1x64xf32, #tpu.memory_space<vmem>>, vector<1x64xf32>
    %c0_5 = arith.constant 0 : index
    %c0_6 = arith.constant 0 : index
    %3 = vector.load %arg7[%c0_5, %c0_6] : memref<1x5xf32, #tpu.memory_space<vmem>>, vector<1x5xf32>
    %c0_7 = arith.constant 0 : index
    %c0_8 = arith.constant 0 : index
    %4 = vector.load %arg2[%c0_7, %c0_8] : memref<8x64xf32, #tpu.memory_space<vmem>>, vector<8x64xf32>
    %cst = arith.constant dense<0.000000e+00> : vector<8x64xf32>
    %5 = tpu.matmul %0, %4, %cst {dimension_numbers = #tpu.dot_dimension_numbers<[1], [0], [0], [1], [0, 0, 1, 1], [], []>} : vector<8x8xf32>, vector<8x64xf32>, vector<8x64xf32> -> vector<8x64xf32>
    %6 = vector.broadcast %1 : vector<1x64xf32> to vector<8x64xf32>
    %7 = arith.addf %5, %6 : vector<8x64xf32>
    %cst_9 = arith.constant 0.000000e+00 : f32
    %8 = vector.broadcast %cst_9 : f32 to vector<8x64xf32>
    %9 = arith.maximumf %7, %8 : vector<8x64xf32>
    %c0_10 = arith.constant 0 : index
    %c0_11 = arith.constant 0 : index
    %10 = vector.load %arg4[%c0_10, %c0_11] : memref<64x64xf32, #tpu.memory_space<vmem>>, vector<64x64xf32>
    %cst_12 = arith.constant dense<0.000000e+00> : vector<8x64xf32>
    %11 = tpu.matmul %9, %10, %cst_12 {dimension_numbers = #tpu.dot_dimension_numbers<[1], [0], [0], [1], [0, 0, 1, 1], [], []>} : vector<8x64xf32>, vector<64x64xf32>, vector<8x64xf32> -> vector<8x64xf32>
    %12 = vector.broadcast %2 : vector<1x64xf32> to vector<8x64xf32>
    %13 = arith.addf %11, %12 : vector<8x64xf32>
    %cst_13 = arith.constant 0.000000e+00 : f32
    %14 = vector.broadcast %cst_13 : f32 to vector<8x64xf32>
    %15 = arith.maximumf %13, %14 : vector<8x64xf32>
    %c0_14 = arith.constant 0 : index
    %c0_15 = arith.constant 0 : index
    %16 = vector.load %arg6[%c0_14, %c0_15] : memref<64x5xf32, #tpu.memory_space<vmem>>, vector<64x5xf32>
    %cst_16 = arith.constant dense<0.000000e+00> : vector<8x5xf32>
    %17 = tpu.matmul %15, %16, %cst_16 {dimension_numbers = #tpu.dot_dimension_numbers<[1], [0], [0], [1], [0, 0, 1, 1], [], []>} : vector<8x64xf32>, vector<64x5xf32>, vector<8x5xf32> -> vector<8x5xf32>
    %18 = vector.broadcast %3 : vector<1x5xf32> to vector<8x5xf32>
    %19 = arith.addf %17, %18 : vector<8x5xf32>
    %c0_17 = arith.constant 0 : index
    %c0_18 = arith.constant 0 : index
    %20 = vector.load %arg8[%c0_17, %c0_18] : memref<8x5xf32, #tpu.memory_space<vmem>>, vector<8x5xf32>
    tpu.vector_store %arg8[%c0_17, %c0_18], %19 {strides = array<i32>} : memref<8x5xf32, #tpu.memory_space<vmem>>, vector<8x5xf32>,
    return
  }
  func.func @transform_0(%arg0: i32) -> (i32, i32) {
    %c0_i32 = arith.constant 0 : i32
    %c0_i32_0 = arith.constant 0 : i32
    return %arg0, %c0_i32 : i32, i32
  }
  func.func @transform_1(%arg0: i32) -> (i32, i32) {
    %c0_i32 = arith.constant 0 : i32
    %c0_i32_0 = arith.constant 0 : i32
    %c0_i32_1 = arith.constant 0 : i32
    return %c0_i32, %c0_i32_0 : i32, i32
  }
  func.func @transform_2(%arg0: i32) -> (i32, i32) {
    %c0_i32 = arith.constant 0 : i32
    %c0_i32_0 = arith.constant 0 : i32
    %c0_i32_1 = arith.constant 0 : i32
    return %c0_i32, %c0_i32_0 : i32, i32
  }
  func.func @transform_3(%arg0: i32) -> (i32, i32) {
    %c0_i32 = arith.constant 0 : i32
    %c0_i32_0 = arith.constant 0 : i32
    %c0_i32_1 = arith.constant 0 : i32
    return %c0_i32, %c0_i32_0 : i32, i32
  }
  func.func @transform_4(%arg0: i32) -> (i32, i32) {
    %c0_i32 = arith.constant 0 : i32
    %c0_i32_0 = arith.constant 0 : i32
    %c0_i32_1 = arith.constant 0 : i32
    return %c0_i32, %c0_i32_0 : i32, i32
  }
  func.func @transform_5(%arg0: i32) -> (i32, i32) {
    %c0_i32 = arith.constant 0 : i32
    %c0_i32_0 = arith.constant 0 : i32
    %c0_i32_1 = arith.constant 0 : i32
    return %c0_i32, %c0_i32_0 : i32, i32
  }
  func.func @transform_6(%arg0: i32) -> (i32, i32) {
    %c0_i32 = arith.constant 0 : i32
    %c0_i32_0 = arith.constant 0 : i32
    %c0_i32_1 = arith.constant 0 : i32
    return %c0_i32, %c0_i32_0 : i32, i32
  }
  func.func @transform_7(%arg0: i32) -> (i32, i32) {
    %c0_i32 = arith.constant 0 : i32
    %c0_i32_0 = arith.constant 0 : i32
    return %arg0, %c0_i32 : i32, i32
  }
}

</mosaic_0001>

<llo_original>
// kernel: _ppo_forward_packed.1
$region0: #{_ppo_forward_packed.1}
  #allocation0 [shape = 'u32[]', space=smem, size = 0x4, offset = 0x4, fixed_abs, tag = 'smem constant byte address 0x4 - core index']
  #allocation1 [shape = 'u32[144,128]{1,0:T(1,128)}', space=vmem, size = 0x12000, scoped, tag = 'internal scratch']
  %s0 = inlined_call_operand.hbm [shape: f32[8,8], index: 0, kind: input, shape index: {}]
  %s1 = inlined_call_operand.hbm [shape: f32[8,64], index: 1, kind: input, shape index: {}]
  %s2 = inlined_call_operand.hbm [shape: f32[1,64], index: 2, kind: input, shape index: {}]
  %s3 = inlined_call_operand.hbm [shape: f32[64,64], index: 3, kind: input, shape index: {}]
  %s4 = inlined_call_operand.hbm [shape: f32[1,64], index: 4, kind: input, shape index: {}]
  %s5 = inlined_call_operand.hbm [shape: f32[64,5], index: 5, kind: input, shape index: {}]
  %s6 = inlined_call_operand.hbm [shape: f32[1,5], index: 6, kind: input, shape index: {}]
  %s7 = inlined_call_operand.hbm [shape: f32[8,5], index: 7, kind: output, shape index: {}]
  %s8 = sld [smem:[#allocation0]]
  $region66: #{_ppo_forward_packed.1} parent=0
    _
  %s10 = ssub.s32 1, %s8
  %s11 = scalar_select 0, %s10, %s8
  $region1: #{_ppo_forward_packed.1} parent=0
    #allocation2 [shape = 'u8[4096]{0}', space=vmem, size = 0x1000, scoped, tag = 'input window, operand 0, single buffered']
    #allocation3 [shape = 's32[1]{0}', space=sflag, size = 0x4, scoped, tag = 'scoped memory for _ppo_forward_packed.1']
    #allocation4 [shape = 's32[1]{0}', space=sflag, size = 0x4, scoped, tag = 'scoped memory for _ppo_forward_packed.1']
    #allocation5 [shape = 'u8[4096]{0}', space=vmem, size = 0x1000, scoped, tag = 'input window, operand 1, single buffered']
    #allocation6 [shape = 's32[1]{0}', space=sflag, size = 0x4, scoped, tag = 'scoped memory for _ppo_forward_packed.1']
    #allocation7 [shape = 'u8[512]{0}', space=vmem, size = 0x400, scoped, tag = 'input window, operand 2, single buffered']
    #allocation8 [shape = 'u8[32768]{0}', space=vmem, size = 0x8000, scoped, tag = 'input window, operand 3, single buffered']
    #allocation9 [shape = 's32[1]{0}', space=sflag, size = 0x4, scoped, tag = 'scoped memory for _ppo_forward_packed.1']
    #allocation10 [shape = 'u8[512]{0}', space=vmem, size = 0x400, scoped, tag = 'input window, operand 4, single buffered']
    #allocation11 [shape = 'u8[32768]{0}', space=vmem, size = 0x8000, scoped, tag = 'input window, operand 5, single buffered']
    #allocation12 [shape = 's32[1]{0}', space=sflag, size = 0x4, scoped, tag = 'scoped memory for _ppo_forward_packed.1']
    #allocation13 [shape = 'u8[512]{0}', space=vmem, size = 0x400, scoped, tag = 'input window, operand 6, single buffered']
    #allocation14 [shape = 'u8[4096]{0}', space=vmem, size = 0x1000, scoped, tag = 'output window, operand 0, single buffered']
    %12 = vsyncpa [#allocation3], 0
    %13 = vsyncpa [#allocation6], 0
    %14 = vsyncpa [#allocation9], 0
    %15 = vsyncpa [#allocation12], 0
    %16 = vsyncpa [#allocation4], 0
    // Predicated region
    $region2: #{_ppo_forward_packed.1} parent=1 // pred_check
      _
    $region3: #{_ppo_forward_packed.1} parent=1 // pred_check_branch
      %18 = sbr.rel (0) target = $region5
    $region4: #{_ppo_forward_packed.1} parent=1 // pred_region
      %s20 = ssub.s32 128, 128
      %21 = vsyncadd [#allocation3], %s20
      %s23 = sshll.u32 [#allocation2], 4
      %s24 = int_to_ptr.vmem [resolvable:$true] %s23
      %26 = dma.hbm_to_vmem [thread:$0]  %s0, 128, %s24, [#allocation3]
    $region5: #{_ppo_forward_packed.1} parent=1 // pred_fallthru
      _
    // Predicated region
    $region6: #{_ppo_forward_packed.1} parent=1 // pred_check
      _
    $region7: #{_ppo_forward_packed.1} parent=1 // pred_check_branch
      %28 = sbr.rel (0) target = $region9
    $region8: #{_ppo_forward_packed.1} parent=1 // pred_region
      %s30 = ssub.s32 128, 128
      %31 = vsyncadd [#allocation6], %s30
      %s33 = sshll.u32 [#allocation5], 4
      %s34 = int_to_ptr.vmem [resolvable:$true] %s33
      %36 = dma.hbm_to_vmem [thread:$0]  %s1, 128, %s34, [#allocation6]
    $region9: #{_ppo_forward_packed.1} parent=1 // pred_fallthru
      _
    // Predicated region
    $region10: #{_ppo_forward_packed.1} parent=1 // pred_check
      _
    $region11: #{_ppo_forward_packed.1} parent=1 // pred_check_branch
      %38 = sbr.rel (0) target = $region13
    $region12: #{_ppo_forward_packed.1} parent=1 // pred_region
      %s40 = ssub.s32 16, 16
      %41 = vsyncadd [#allocation6], %s40
      %s43 = sshll.u32 [#allocation7], 4
      %s44 = int_to_ptr.vmem [resolvable:$true] %s43
      %46 = dma.hbm_to_vmem [thread:$0]  %s2, 16, %s44, [#allocation6]
    $region13: #{_ppo_forward_packed.1} parent=1 // pred_fallthru
      _
    // Predicated region
    $region14: #{_ppo_forward_packed.1} parent=1 // pred_check
      _
    $region15: #{_ppo_forward_packed.1} parent=1 // pred_check_branch
      %48 = sbr.rel (0) target = $region17
    $region16: #{_ppo_forward_packed.1} parent=1 // pred_region
      %s50 = ssub.s32 1024, 1024
      %51 = vsyncadd [#allocation9], %s50
      %s52 = sshll.u32 [#allocation8], 4
      %s53 = int_to_ptr.vmem [resolvable:$true] %s52
      %58 = dma.hbm_to_vmem [thread:$0]  %s3, 1024, %s53, [#allocation9], 128, 128, 8
    $region17: #{_ppo_forward_packed.1} parent=1 // pred_fallthru
      _
    // Predicated region
    $region18: #{_ppo_forward_packed.1} parent=1 // pred_check
      _
    $region19: #{_ppo_forward_packed.1} parent=1 // pred_check_branch
      %60 = sbr.rel (0) target = $region21
    $region20: #{_ppo_forward_packed.1} parent=1 // pred_region
      %s62 = ssub.s32 16, 16
      %63 = vsyncadd [#allocation9], %s62
      %s65 = sshll.u32 [#allocation10], 4
      %s66 = int_to_ptr.vmem [resolvable:$true] %s65
      %68 = dma.hbm_to_vmem [thread:$0]  %s4, 16, %s66, [#allocation9]
    $region21: #{_ppo_forward_packed.1} parent=1 // pred_fallthru
      _
    // Predicated region
    $region22: #{_ppo_forward_packed.1} parent=1 // pred_check
      _
    $region23: #{_ppo_forward_packed.1} parent=1 // pred_check_branch
      %70 = sbr.rel (0) target = $region25
    $region24: #{_ppo_forward_packed.1} parent=1 // pred_region
      %s72 = ssub.s32 1024, 1024
      %73 = vsyncadd [#allocation12], %s72
      %s74 = sshll.u32 [#allocation11], 4
      %s75 = int_to_ptr.vmem [resolvable:$true] %s74
      %80 = dma.hbm_to_vmem [thread:$0]  %s5, 1024, %s75, [#allocation12], 128, 128, 8
    $region25: #{_ppo_forward_packed.1} parent=1 // pred_fallthru
      _
    // Predicated region
    $region26: #{_ppo_forward_packed.1} parent=1 // pred_check
      _
    $region27: #{_ppo_forward_packed.1} parent=1 // pred_check_branch
      %82 = sbr.rel (0) target = $region29
    $region28: #{_ppo_forward_packed.1} parent=1 // pred_region
      %s84 = ssub.s32 16, 16
      %85 = vsyncadd [#allocation12], %s84
      %s87 = sshll.u32 [#allocation13], 4
      %s88 = int_to_ptr.vmem [resolvable:$true] %s87
      %90 = dma.hbm_to_vmem [thread:$0]  %s6, 16, %s88, [#allocation12]
    $region29: #{_ppo_forward_packed.1} parent=1 // pred_fallthru
      _
    // Predicated region
    $region30: #{_ppo_forward_packed.1} parent=1 // pred_check
      _
    $region31: #{_ppo_forward_packed.1} parent=1 // pred_check_branch
      %92 = sbr.rel (0) target = $region33
    $region32: #{_ppo_forward_packed.1} parent=1 // pred_region
      %93 = dma.done [#allocation3], 128
    $region33: #{_ppo_forward_packed.1} parent=1 // pred_fallthru
      _
    // Predicated region
    $region34: #{_ppo_forward_packed.1} parent=1 // pred_check
      _
    $region35: #{_ppo_forward_packed.1} parent=1 // pred_check_branch
      %95 = sbr.rel (0) target = $region37
    $region36: #{_ppo_forward_packed.1} parent=1 // pred_region
      %96 = dma.done [#allocation6], 128
    $region37: #{_ppo_forward_packed.1} parent=1 // pred_fallthru
      _
    // Predicated region
    $region38: #{_ppo_forward_packed.1} parent=1 // pred_check
      _
    $region39: #{_ppo_forward_packed.1} parent=1 // pred_check_branch
      %98 = sbr.rel (0) target = $region41
    $region40: #{_ppo_forward_packed.1} parent=1 // pred_region
      %99 = dma.done [#allocation6], 16
    $region41: #{_ppo_forward_packed.1} parent=1 // pred_fallthru
      _
    // Predicated region
    $region42: #{_ppo_forward_packed.1} parent=1 // pred_check
      _
    $region43: #{_ppo_forward_packed.1} parent=1 // pred_check_branch
      %101 = sbr.rel (0) target = $region45
    $region44: #{_ppo_forward_packed.1} parent=1 // pred_region
      %102 = dma.done [#allocation9], 1024
    $region45: #{_ppo_forward_packed.1} parent=1 // pred_fallthru
      _
    // Predicated region
    $region46: #{_ppo_forward_packed.1} parent=1 // pred_check
      _
    $region47: #{_ppo_forward_packed.1} parent=1 // pred_check_branch
      %104 = sbr.rel (0) target = $region49
    $region48: #{_ppo_forward_packed.1} parent=1 // pred_region
      %105 = dma.done [#allocation9], 16
    $region49: #{_ppo_forward_packed.1} parent=1 // pred_fallthru
      _
    // Predicated region
    $region50: #{_ppo_forward_packed.1} parent=1 // pred_check
      _
    $region51: #{_ppo_forward_packed.1} parent=1 // pred_check_branch
      %107 = sbr.rel (0) target = $region53
    $region52: #{_ppo_forward_packed.1} parent=1 // pred_region
      %108 = dma.done [#allocation12], 1024
    $region53: #{_ppo_forward_packed.1} parent=1 // pred_fallthru
      _
    // Predicated region
    $region54: #{_ppo_forward_packed.1} parent=1 // pred_check
      _
    $region55: #{_ppo_forward_packed.1} parent=1 // pred_check_branch
      %110 = sbr.rel (0) target = $region57
    $region56: #{_ppo_forward_packed.1} parent=1 // pred_region
      %111 = dma.done [#allocation12], 16
    $region57: #{_ppo_forward_packed.1} parent=1 // pred_fallthru
      _
    %v112 = vld [vmem:[#allocation2] sm:$0xff]
    %v113 = vld [vmem:[#allocation7] sm:$0x1]
    %v114 = vld [vmem:[#allocation10] sm:$0x1]
    %v115 = vld [vmem:[#allocation13] sm:$0x1]
    %v116 = vld [vmem:[#allocation5] sm:$0xff]
    %v118 = vlaneseq
    %v119 = vshrl.u32 %v118, 7
    %v120 = vsub.s32 0, %v119
    %v121 = vrot.slane %v113, %v120
    %vm123 = vcmask 64512
    %v125 = vsel %vm123, %v112, 0
    %127 = vmatprep.subr.mxu0 0.0
    %128 = vmatpush1.msra.mxu0 %v116
    %129 = vmatprep.subr.mxu0 0.0
    %130 = vmatpush1.msra.mxu0 0.0
    %131 = vmatprep.subr.mxu0 0.0
    %132 = vmatpush1.msra.mxu0 0.0
    %133 = vmatprep.subr.mxu0 0.0
    %134 = vmatpush1.msra.mxu0 0.0
    %135 = vmatprep.subr.mxu0 0.0
    %136 = vmatpush1.msra.mxu0 0.0
    %137 = vmatprep.subr.mxu0 0.0
    %138 = vmatpush1.msra.mxu0 0.0
    %139 = vmatprep.subr.mxu0 0.0
    %140 = vmatpush1.msra.mxu0 0.0
    %141 = vmatprep.subr.mxu0 0.0
    %142 = vmatpush1.msra.mxu0 0.0
    %143 = vmatprep.subr.mxu0 0.0
    %144 = vmatpush1.msra.mxu0 0.0
    %145 = vmatprep.subr.mxu0 0.0
    %146 = vmatpush1.msra.mxu0 0.0
    %147 = vmatprep.subr.mxu0 0.0
    %148 = vmatpush1.msra.mxu0 0.0
    %149 = vmatprep.subr.mxu0 0.0
    %150 = vmatpush1.msra.mxu0 0.0
    %151 = vmatprep.subr.mxu0 0.0
    %152 = vmatpush1.msra.mxu0 0.0
    %153 = vmatprep.subr.mxu0 0.0
    %154 = vmatpush1.msra.mxu0 0.0
    %155 = vmatprep.subr.mxu0 0.0
    %156 = vmatpush1.msra.mxu0 0.0
    %157 = vmatprep.subr.mxu0 0.0
    %158 = vmatpush1.msra.mxu0 0.0
    %159 = vmatprep.subr.mxu0 0.0
    %160 = vmatpush1.msra.mxu0 0.0
    %161 = vmatprep.subr.mxu0 0.0
    %162 = vmatpush1.msra.mxu0 0.0
    %163 = vmatprep.subr.mxu0 0.0
    %164 = vmatpush1.msra.mxu0 0.0
    %165 = vmatprep.subr.mxu0 0.0
    %166 = vmatpush1.msra.mxu0 0.0
    %167 = vmatprep.subr.mxu0 0.0
    %168 = vmatpush1.msra.mxu0 0.0
    %169 = vmatprep.subr.mxu0 0.0
    %170 = vmatpush1.msra.mxu0 0.0
    %171 = vmatprep.subr.mxu0 0.0
    %172 = vmatpush1.msra.mxu0 0.0
    %173 = vmatprep.subr.mxu0 0.0
    %174 = vmatpush1.msra.mxu0 0.0
    %175 = vmatprep.subr.mxu0 0.0
    %176 = vmatpush1.msra.mxu0 0.0
    %177 = vmatprep.subr.mxu0 0.0
    %178 = vmatpush1.msra.mxu0 0.0
    %179 = vmatprep.subr.mxu0 0.0
    %180 = vmatpush1.msra.mxu0 0.0
    %181 = vmatprep.subr.mxu0 0.0
    %182 = vmatpush1.msra.mxu0 0.0
    %183 = vmatprep.subr.mxu0 0.0
    %184 = vmatpush1.msra.mxu0 0.0
    %185 = vmatprep.subr.mxu0 0.0
    %186 = vmatpush1.msra.mxu0 0.0
    %187 = vmatprep.subr.mxu0 0.0
    %188 = vmatpush1.msra.mxu0 0.0
    %189 = vmatprep.subr.mxu0 0.0
    %190 = vmatpush1.msra.mxu0 0.0
    %191 = vmatprep.mubr.f32.mxu0 0.0
    %192 = vmatmul.mubr.f32.gmra.mrb[0].mxu0 %v125
    %v193 = vpop.f32.mrb[0].mxu0
    %v194 = vadd.f32 %v121, %v193
    %v195 = vpop.f32.mrb[0].mxu0
    %196 = vdwg.mxu0
    %v197 = vmax.f32 %v194, 0.0
    %v198 = vld [vmem:[#allocation8] sm:$0xff]
    %v199 = vld [vmem:[#allocation8 + $0x8] sm:$0xff]
    %v200 = vld [vmem:[#allocation8 + $0x10] sm:$0xff]
    %v201 = vld [vmem:[#allocation8 + $0x18] sm:$0xff]
    %v202 = vld [vmem:[#allocation8 + $0x20] sm:$0xff]
    %v203 = vld [vmem:[#allocation8 + $0x28] sm:$0xff]
    %v204 = vld [vmem:[#allocation8 + $0x30] sm:$0xff]
    %v205 = vld [vmem:[#allocation8 + $0x38] sm:$0xff]
    %v207 = vlaneseq
    %v208 = vshrl.u32 %v207, 7
    %v209 = vsub.s32 0, %v208
    %v210 = vrot.slane %v114, %v209
    %vm212 = vcmask 523264
    %v214 = vsel %vm212, %v197, 0
    %216 = vmatprep.subr.mxu0 0.0
    %217 = vmatpush1.msra.mxu0 %v198
    %218 = vmatprep.subr.mxu0 0.0
    %219 = vmatpush1.msra.mxu0 %v199
    %220 = vmatprep.subr.mxu0 0.0
    %221 = vmatpush1.msra.mxu0 %v200
    %222 = vmatprep.subr.mxu0 0.0
    %223 = vmatpush1.msra.mxu0 %v201
    %224 = vmatprep.subr.mxu0 0.0
    %225 = vmatpush1.msra.mxu0 %v202
    %226 = vmatprep.subr.mxu0 0.0
    %227 = vmatpush1.msra.mxu0 %v203
    %228 = vmatprep.subr.mxu0 0.0
    %229 = vmatpush1.msra.mxu0 %v204
    %230 = vmatprep.subr.mxu0 0.0
    %231 = vmatpush1.msra.mxu0 %v205
    %232 = vmatprep.subr.mxu0 0.0
    %233 = vmatpush1.msra.mxu0 0.0
    %234 = vmatprep.subr.mxu0 0.0
    %235 = vmatpush1.msra.mxu0 0.0
    %236 = vmatprep.subr.mxu0 0.0
    %237 = vmatpush1.msra.mxu0 0.0
    %238 = vmatprep.subr.mxu0 0.0
    %239 = vmatpush1.msra.mxu0 0.0
    %240 = vmatprep.subr.mxu0 0.0
    %241 = vmatpush1.msra.mxu0 0.0
    %242 = vmatprep.subr.mxu0 0.0
    %243 = vmatpush1.msra.mxu0 0.0
    %244 = vmatprep.subr.mxu0 0.0
    %245 = vmatpush1.msra.mxu0 0.0
    %246 = vmatprep.subr.mxu0 0.0
    %247 = vmatpush1.msra.mxu0 0.0
    %248 = vmatprep.subr.mxu0 0.0
    %249 = vmatpush1.msra.mxu0 0.0
    %250 = vmatprep.subr.mxu0 0.0
    %251 = vmatpush1.msra.mxu0 0.0
    %252 = vmatprep.subr.mxu0 0.0
    %253 = vmatpush1.msra.mxu0 0.0
    %254 = vmatprep.subr.mxu0 0.0
    %255 = vmatpush1.msra.mxu0 0.0
    %256 = vmatprep.subr.mxu0 0.0
    %257 = vmatpush1.msra.mxu0 0.0
    %258 = vmatprep.subr.mxu0 0.0
    %259 = vmatpush1.msra.mxu0 0.0
    %260 = vmatprep.subr.mxu0 0.0
    %261 = vmatpush1.msra.mxu0 0.0
    %262 = vmatprep.subr.mxu0 0.0
    %263 = vmatpush1.msra.mxu0 0.0
    %264 = vmatprep.subr.mxu0 0.0
    %265 = vmatpush1.msra.mxu0 0.0
    %266 = vmatprep.subr.mxu0 0.0
    %267 = vmatpush1.msra.mxu0 0.0
    %268 = vmatprep.subr.mxu0 0.0
    %269 = vmatpush1.msra.mxu0 0.0
    %270 = vmatprep.subr.mxu0 0.0
    %271 = vmatpush1.msra.mxu0 0.0
    %272 = vmatprep.subr.mxu0 0.0
    %273 = vmatpush1.msra.mxu0 0.0
    %274 = vmatprep.subr.mxu0 0.0
    %275 = vmatpush1.msra.mxu0 0.0
    %276 = vmatprep.subr.mxu0 0.0
    %277 = vmatpush1.msra.mxu0 0.0
    %278 = vmatprep.subr.mxu0 0.0
    %279 = vmatpush1.msra.mxu0 0.0
    %280 = vmatprep.mubr.f32.mxu0 0.0
    %281 = vmatmul.mubr.f32.gmra.mrb[0].mxu0 %v214
    %v282 = vpop.f32.mrb[0].mxu0
    %v283 = vadd.f32 %v210, %v282
    %v284 = vpop.f32.mrb[0].mxu0
    %285 = vdwg.mxu0
    %v286 = vmax.f32 %v283, 0.0
    %v287 = vld [vmem:[#allocation11] sm:$0xff]
    %v288 = vld [vmem:[#allocation11 + $0x8] sm:$0xff]
    %v289 = vld [vmem:[#allocation11 + $0x10] sm:$0xff]
    %v290 = vld [vmem:[#allocation11 + $0x18] sm:$0xff]
    %v291 = vld [vmem:[#allocation11 + $0x20] sm:$0xff]
    %v292 = vld [vmem:[#allocation11 + $0x28] sm:$0xff]
    %v293 = vld [vmem:[#allocation11 + $0x30] sm:$0xff]
    %v294 = vld [vmem:[#allocation11 + $0x38] sm:$0xff]
    %v296 = vlaneseq
    %v297 = vshrl.u32 %v296, 7
    %v298 = vsub.s32 0, %v297
    %v299 = vrot.slane %v115, %v298
    %v302 = vsel %vm212, %v286, 0
    %304 = vmatprep.subr.mxu0 0.0
    %305 = vmatpush1.msra.mxu0 %v287
    %306 = vmatprep.subr.mxu0 0.0
    %307 = vmatpush1.msra.mxu0 %v288
    %308 = vmatprep.subr.mxu0 0.0
    %309 = vmatpush1.msra.mxu0 %v289
    %310 = vmatprep.subr.mxu0 0.0
    %311 = vmatpush1.msra.mxu0 %v290
    %312 = vmatprep.subr.mxu0 0.0
    %313 = vmatpush1.msra.mxu0 %v291
    %314 = vmatprep.subr.mxu0 0.0
    %315 = vmatpush1.msra.mxu0 %v292
    %316 = vmatprep.subr.mxu0 0.0
    %317 = vmatpush1.msra.mxu0 %v293
    %318 = vmatprep.subr.mxu0 0.0
    %319 = vmatpush1.msra.mxu0 %v294
    %320 = vmatprep.subr.mxu0 0.0
    %321 = vmatpush1.msra.mxu0 0.0
    %322 = vmatprep.subr.mxu0 0.0
    %323 = vmatpush1.msra.mxu0 0.0
    %324 = vmatprep.subr.mxu0 0.0
    %325 = vmatpush1.msra.mxu0 0.0
    %326 = vmatprep.subr.mxu0 0.0
    %327 = vmatpush1.msra.mxu0 0.0
    %328 = vmatprep.subr.mxu0 0.0
    %329 = vmatpush1.msra.mxu0 0.0
    %330 = vmatprep.subr.mxu0 0.0
    %331 = vmatpush1.msra.mxu0 0.0
    %332 = vmatprep.subr.mxu0 0.0
    %333 = vmatpush1.msra.mxu0 0.0
    %334 = vmatprep.subr.mxu0 0.0
    %335 = vmatpush1.msra.mxu0 0.0
    %336 = vmatprep.subr.mxu0 0.0
    %337 = vmatpush1.msra.mxu0 0.0
    %338 = vmatprep.subr.mxu0 0.0
    %339 = vmatpush1.msra.mxu0 0.0
    %340 = vmatprep.subr.mxu0 0.0
    %341 = vmatpush1.msra.mxu0 0.0
    %342 = vmatprep.subr.mxu0 0.0
    %343 = vmatpush1.msra.mxu0 0.0
    %344 = vmatprep.subr.mxu0 0.0
    %345 = vmatpush1.msra.mxu0 0.0
    %346 = vmatprep.subr.mxu0 0.0
    %347 = vmatpush1.msra.mxu0 0.0
    %348 = vmatprep.subr.mxu0 0.0
    %349 = vmatpush1.msra.mxu0 0.0
    %350 = vmatprep.subr.mxu0 0.0
    %351 = vmatpush1.msra.mxu0 0.0
    %352 = vmatprep.subr.mxu0 0.0
    %353 = vmatpush1.msra.mxu0 0.0
    %354 = vmatprep.subr.mxu0 0.0
    %355 = vmatpush1.msra.mxu0 0.0
    %356 = vmatprep.subr.mxu0 0.0
    %357 = vmatpush1.msra.mxu0 0.0
    %358 = vmatprep.subr.mxu0 0.0
    %359 = vmatpush1.msra.mxu0 0.0
    %360 = vmatprep.subr.mxu0 0.0
    %361 = vmatpush1.msra.mxu0 0.0
    %362 = vmatprep.subr.mxu0 0.0
    %363 = vmatpush1.msra.mxu0 0.0
    %364 = vmatprep.subr.mxu0 0.0
    %365 = vmatpush1.msra.mxu0 0.0
    %366 = vmatprep.subr.mxu0 0.0
    %367 = vmatpush1.msra.mxu0 0.0
    %368 = vmatprep.mubr.f32.mxu0 0.0
    %369 = vmatmul.mubr.f32.gmra.mrb[0].mxu0 %v302
    %v370 = vpop.f32.mrb[0].mxu0
    %v371 = vadd.f32 %v299, %v370
    %v372 = vpop.f32.mrb[0].mxu0
    %373 = vdwg.mxu0
    %vm374 = vcmask 39936
    %375 = vst.msk [vmem:[#allocation14] sm:$0xff] %vm374, %v371
    // Predicated region
    $region58: #{_ppo_forward_packed.1} parent=1 // pred_check
      _
    $region59: #{_ppo_forward_packed.1} parent=1 // pred_check_branch
      %377 = sbr.rel (0) target = $region61
    $region60: #{_ppo_forward_packed.1} parent=1 // pred_region
      %s379 = ssub.s32 128, 128
      %380 = vsyncadd [#allocation4], %s379
      %s382 = sshll.u32 [#allocation14], 4
      %s383 = int_to_ptr.vmem [resolvable:$true] %s382
      %385 = dma.vmem_to_hbm [thread:$0]  %s383, 128, %s7, [#allocation4]
    $region61: #{_ppo_forward_packed.1} parent=1 // pred_fallthru
      _
    // Predicated region
    $region62: #{_ppo_forward_packed.1} parent=1 // pred_check
      _
    $region63: #{_ppo_forward_packed.1} parent=1 // pred_check_branch
      %387 = sbr.rel (0) target = $region65
    $region64: #{_ppo_forward_packed.1} parent=1 // pred_region
      %388 = dma.done [#allocation4], 128
    $region65: #{_ppo_forward_packed.1} parent=1 // pred_fallthru
      _
    %389 = vsyncpa [#allocation3], 1
    %390 = vsyncpa [#allocation6], 1
    %391 = vsyncpa [#allocation9], 1
    %392 = vsyncpa [#allocation12], 1
    %393 = vsyncpa [#allocation4], 1

</llo_original>
